<compile_context>
chip_gen: v5e
topology: v5e:2x2
jax: 0.10.0
libtpu: 0.0.40
codegen_flags: <defaults>
</compile_context>

<pallas_src>
import functools

import numpy as np
import jax
import jax.numpy as jnp
from jax import lax
from jax.experimental import pallas as pl
from jax.experimental.pallas import tpu as pltpu


# ---------------------------------------------------------------------------
# Per-generation VMEM budget (do not hard-code 32 MiB).
# ---------------------------------------------------------------------------
@functools.lru_cache(maxsize=1)
def _vmem_limit():
    cap = None
    try:
        info = pltpu.get_tpu_info()
        for name in ("vmem_capacity_bytes", "vmem_size_bytes", "vmem_bytes"):
            cap = getattr(info, name, None)
            if cap:
                break
    except Exception:
        cap = None
    if not cap:
        cap = 64 * 1024 * 1024          # conservative fallback, valid on v5e/v6e/v7x
    # ~75% of physical: ~96 MiB on 128-MiB parts (v5e/v6e), ~48 MiB on v7x (64 MiB).
    return int(cap) * 3 // 4


def _pick_tile(s, target):
    """Largest row tile <= target that divides s and is a multiple of 8 (else full s)."""
    if s <= target:
        return s
    t = (min(target, s) // 8) * 8
    while t >= 8:
        if s % t == 0:
            return t
        t -= 8
    return s  # TODO(synk): prime/odd sequence lengths fall back to a single full tile


def _attn_vmem_estimate(tq, s_k, d_model, num_heads, single_buffer):
    """Rough VMEM bytes for one attention grid step (inputs + outputs + temps)."""
    cb = 1 if single_buffer else 2               # buffers held for constant blocks
    b = 0
    b += 2 * tq * d_model * 4                    # x_q tile (double-buffered, f32)
    b += cb * d_model * d_model * 2              # W_q (bf16, resident)
    b += cb * 2 * s_k * d_model * 2              # K + V (bf16, resident)
    b += cb * d_model * d_model * 2              # W_h (bf16, resident)
    b += cb * d_model * 4                        # b_h
    b += 2 * tq * d_model * 4                    # H output tile (double-buffered, f32)
    b += 2 * num_heads * tq * s_k * 2            # A output tile (double-buffered, bf16)
    b += 3 * tq * s_k * 4                        # in-kernel score/prob temporaries (f32)
    b += 2 * tq * d_model * 4                    # q / ctx temporaries
    return b


def _pick_q_tile(s_q, s_k, d_model, num_heads, q_tile, vmem_limit, single_buffer):
    # Keep >= 2 grid steps when possible so the "parallel" axis shards onto both
    # v7x TensorCores; then shrink until the VMEM estimate fits the budget.
    target = min(q_tile, s_q // 2) if s_q >= 16 else s_q
    tq = _pick_tile(s_q, max(8, target))
    while tq > 8 and _attn_vmem_estimate(tq, s_k, d_model, num_heads,
                                         single_buffer) > 0.7 * vmem_limit:
        nt = _pick_tile(s_q, max(8, tq // 2))
        if nt >= tq:
            break
        tq = nt
    return tq


# ---------------------------------------------------------------------------
# Projection kernel: y = x @ W  (bf16 MXU operands, f32 accumulation).
# Used for the fused [K|V] projection (self-attention) or separate K/V
# projections (cross-attention).  Output is bf16 (halves the HBM round-trip).
# ---------------------------------------------------------------------------
def _proj_kernel(x_ref, w_ref, o_ref):
    o_ref[...] = jnp.dot(x_ref[...].astype(jnp.bfloat16), w_ref[...],
                         preferred_element_type=jnp.float32).astype(o_ref.dtype)


def _linear_nobias(x, w_bf16, *, row_tile=512, out_dtype=jnp.bfloat16,
                   single_buffer=True, vmem_limit=None):
    s, d_in = x.shape
    d_out = w_bf16.shape[1]
    target = min(row_tile, s // 2) if s >= 16 else s
    ts = _pick_tile(s, max(8, target))
    w_kwargs = {"pipeline_mode": pl.Buffered(1)} if single_buffer else {}
    return pl.pallas_call(
        _proj_kernel,
        out_shape=jax.ShapeDtypeStruct((s, d_out), out_dtype),
        grid=(s // ts,),
        in_specs=[pl.BlockSpec((ts, d_in), lambda i: (i, 0)),
                  pl.BlockSpec((d_in, d_out), lambda i: (0, 0), **w_kwargs)],
        out_specs=pl.BlockSpec((ts, d_out), lambda i: (i, 0)),
        compiler_params=pltpu.CompilerParams(
            dimension_semantics=("parallel",),
            vmem_limit_bytes=vmem_limit),
    )(x, w_bf16)


# ---------------------------------------------------------------------------
# Attention kernel: tiled over query rows; K/V kept resident (single-buffered).
# Q is projected in-kernel from the x_q tile (scale folded into W_q).  Per head
# (static unroll): bf16 score matmul (f32 acc), f32 softmax, bf16 A writeback,
# bf16 A @ V; per-head contexts concatenated in-register (lane-dense) and fed
# directly into the dense W_h output projection.
# ---------------------------------------------------------------------------
def _make_mha_kernel(num_heads, d_k):
    dn = (((1,), (1,)), ((), ()))   # contract the feature axis of both operands

    def kernel(x_ref, wq_ref, k_ref, v_ref, wh_ref, bh_ref, h_ref, a_ref):
        # Fused in-kernel Q projection (1/sqrt(d_k) already folded into W_q).
        x = x_ref[...].astype(jnp.bfloat16)
        q = jnp.dot(x, wq_ref[...],
                    preferred_element_type=jnp.float32).astype(jnp.bfloat16)
        k = k_ref[...]                                             # (s_k, d_model) bf16
        v = v_ref[...]                                             # (s_k, d_model) bf16

        ctx_heads = []
        for hd in range(num_heads):                                # static unroll
            sl = slice(hd * d_k, (hd + 1) * d_k)
            s = lax.dot_general(q[:, sl], k[:, sl], dn,
                                preferred_element_type=jnp.float32)  # (tq, s_k) f32
            m = jnp.max(s, axis=-1, keepdims=True)
            p = jnp.exp(s - m)                                     # f32 elementwise (v5e-safe)
            a = p * pl.reciprocal(jnp.sum(p, axis=-1, keepdims=True), approx=True)
            a_bf = a.astype(jnp.bfloat16)
            a_ref[hd] = a_bf                                       # bf16 A writeback
            ctx_heads.append(jnp.dot(a_bf, v[:, sl],
                                     preferred_element_type=jnp.float32))

        # Lane-dense (tq, d_model) context, consumed directly by the W_h matmul.
        ctx = jnp.concatenate(ctx_heads, axis=-1).astype(jnp.bfloat16)
        h_ref[...] = (jnp.dot(ctx, wh_ref[...], preferred_element_type=jnp.float32)
                      + bh_ref[...]).astype(h_ref.dtype)

    return kernel


def _mha_impl(x_q, x_k, x_v, params, num_heads, *, q_tile, single_buffer):
    d_model = params["wq"].shape[0]
    assert d_model % num_heads == 0
    d_k = d_model // num_heads
    vmem_limit = _vmem_limit()

    # Fold 1/sqrt(d_k) into W_q; bf16 weights feed the MXU (f32 accumulation).
    wq = (params["wq"] * jnp.float32(1.0 / np.sqrt(d_k))).astype(jnp.bfloat16)
    wk = params["wk"].astype(jnp.bfloat16)
    wv = params["wv"].astype(jnp.bfloat16)
    wh = params["wh"].astype(jnp.bfloat16)
    bh = params["bh"].reshape(1, d_model).astype(jnp.float32)

    if (x_q is x_k) and (x_k is x_v):
        # Self-attention: fused [K|V] projection; Q is projected inside the
        # attention kernel (removes the Q HBM round-trip entirely).
        wkv = jnp.concatenate([wk, wv], axis=1)                    # (d_model, 2*d_model)
        kv = _linear_nobias(x_q, wkv, single_buffer=single_buffer,
                            vmem_limit=vmem_limit)                 # (S, 2*d_model) bf16
        k_arr, k_col = kv, 0
        v_arr, v_col = kv, 1
    else:
        # Cross-attention: separate K / V projections (Q still fused in-kernel).
        k_arr, k_col = _linear_nobias(x_k, wk, single_buffer=single_buffer,
                                      vmem_limit=vmem_limit), 0
        v_arr, v_col = _linear_nobias(x_v, wv, single_buffer=single_buffer,
                                      vmem_limit=vmem_limit), 0

    s_q, s_k = x_q.shape[0], x_k.shape[0]
    tq = _pick_q_tile(s_q, s_k, d_model, num_heads, q_tile, vmem_limit, single_buffer)

    const_kwargs = {"pipeline_mode": pl.Buffered(1)} if single_buffer else {}
    kernel = _make_mha_kernel(num_heads, d_k)

    h_out, a_out = pl.pallas_call(
        kernel,
        out_shape=(jax.ShapeDtypeStruct((s_q, d_model), jnp.float32),
                   jax.ShapeDtypeStruct((num_heads, s_q, s_k), jnp.bfloat16)),
        grid=(s_q // tq,),
        in_specs=[
            pl.BlockSpec((tq, d_model), lambda i: (i, 0)),                        # x_q tile
            pl.BlockSpec((d_model, d_model), lambda i: (0, 0), **const_kwargs),   # W_q
            pl.BlockSpec((s_k, d_model), lambda i, c=k_col: (0, c), **const_kwargs),  # K
            pl.BlockSpec((s_k, d_model), lambda i, c=v_col: (0, c), **const_kwargs),  # V
            pl.BlockSpec((d_model, d_model), lambda i: (0, 0), **const_kwargs),   # W_h
            pl.BlockSpec((1, d_model), lambda i: (0, 0), **const_kwargs),         # b_h
        ],
        out_specs=(pl.BlockSpec((tq, d_model), lambda i: (i, 0)),
                   pl.BlockSpec((num_heads, tq, s_k), lambda i: (0, i, 0))),
        compiler_params=pltpu.CompilerParams(
            dimension_semantics=("parallel",),
            vmem_limit_bytes=vmem_limit),
    )(x_q, wq, k_arr, v_arr, wh, bh)

    return h_out, a_out


def multi_head_attention(x_q, x_k, x_v, params, num_heads, *, q_tile=256):
    """Pallas forward of MultiHeadAttention; returns (H, A) like the PyTorch module.

    Note: A is returned in bfloat16 (caller-visible dtype change, per perf review).
    """
    try:
        return _mha_impl(x_q, x_k, x_v, params, num_heads,
                         q_tile=q_tile, single_buffer=True)
    except Exception:
        # Fallback if this JAX build rejects pipeline_mode=pl.Buffered(1).
        return _mha_impl(x_q, x_k, x_v, params, num_heads,
                         q_tile=q_tile, single_buffer=False)


# ---------------------------------------------------------------------------
# Pure-JAX reference mirroring the PyTorch forward exactly (f32 throughout).
# ---------------------------------------------------------------------------
def mha_ref(x_q, x_k, x_v, params, num_heads):
    d_model = params["wq"].shape[0]
    d_k = d_model // num_heads
    s_q, s_k = x_q.shape[0], x_k.shape[0]
    q = (x_q @ params["wq"]).reshape(s_q, num_heads, d_k).transpose(1, 0, 2)
    k = (x_k @ params["wk"]).reshape(s_k, num_heads, d_k).transpose(1, 0, 2)
    v = (x_v @ params["wv"]).reshape(s_k, num_heads, d_k).transpose(1, 0, 2)
    a = jax.nn.softmax(jnp.einsum("hqd,hkd->hqk", q, k) / np.sqrt(d_k), axis=-1)
    h = jnp.einsum("hqk,hkd->hqd", a, v).transpose(1, 0, 2).reshape(s_q, d_model)
    return h @ params["wh"] + params["bh"], a


if __name__ == "__main__":
    # Small but lane-dense shapes (d_model and S multiples of 128).
    S, d_model, num_heads = 256, 128, 4

    key = jax.random.PRNGKey(0)
    ks = jax.random.split(key, 7)

    def nrm(k, shape, scale=0.1):
        return (scale * jax.random.normal(k, shape)).astype(jnp.float32)

    params = {
        "wq": nrm(ks[0], (d_model, d_model)),
        "wk": nrm(ks[1], (d_model, d_model)),
        "wv": nrm(ks[2], (d_model, d_model)),
        "wh": nrm(ks[3], (d_model, d_model)),
        "bh": nrm(ks[4], (d_model,)),
    }
    x = (0.5 * jax.random.normal(ks[5], (S, d_model))).astype(jnp.float32)

    # --- self-attention (Encoder usage): fused [K|V] proj + in-kernel Q proj ---
    h_out, a_out = multi_head_attention(x, x, x, params, num_heads)
    h_out = jax.block_until_ready(h_out)
    a_out = jax.block_until_ready(a_out)
    h_ref, a_ref = mha_ref(x, x, x, params, num_heads)

    assert h_out.shape == (S, d_model) and h_out.dtype == jnp.float32
    assert a_out.shape == (num_heads, S, S)
    # Tolerance covers bf16 MXU operands / bf16 A writeback and the approx (EUP)
    # reciprocal in the softmax; all accumulation is f32.
    assert np.allclose(np.asarray(a_out, dtype=np.float32), np.asarray(a_ref),
                       atol=1e-2, rtol=1e-2), "attention-probability mismatch"
    assert np.allclose(np.asarray(h_out), np.asarray(h_ref),
                       atol=1e-2, rtol=1e-2), "attention-output mismatch"

    # --- cross-attention path (separate K / V projections) ---
    x_kv = (0.5 * jax.random.normal(ks[6], (128, d_model))).astype(jnp.float32)
    h2, a2 = multi_head_attention(x, x_kv, x_kv, params, num_heads)
    h2 = jax.block_until_ready(h2)
    h2_ref, a2_ref = mha_ref(x, x_kv, x_kv, params, num_heads)
    assert np.allclose(np.asarray(a2, dtype=np.float32), np.asarray(a2_ref),
                       atol=1e-2, rtol=1e-2), "cross-attention A mismatch"
    assert np.allclose(np.asarray(h2), np.asarray(h2_ref),
                       atol=1e-2, rtol=1e-2), "cross-attention H mismatch"

    print("KERNEL_OK")
</pallas_src>

<mosaic_0001>
module attributes {stable_mosaic.version = 11 : i64} {
  func.func @_proj_kernel(%arg0: i32, %arg1: memref<128x128xf32, #tpu.memory_space<vmem>>, %arg2: memref<128x256xbf16, #tpu.memory_space<vmem>>, %arg3: memref<128x256xbf16, #tpu.memory_space<vmem>>) attributes {dimension_semantics = [#tpu.dimension_semantics<parallel>], iteration_bounds = array<i64: 2>, scalar_prefetch = 0 : i64, scratch_operands = 0 : i64, tpu.core_type = #tpu.core_type<tc>, window_params = [{transform_indices = @transform_0, window_bounds = array<i64: 128, 128>}, {pipeline_mode = #tpu.pipeline_mode<synchronous>, transform_indices = @transform_1, window_bounds = array<i64: 128, 256>}, {transform_indices = @transform_2, window_bounds = array<i64: 128, 256>}]} {
    %c0 = arith.constant 0 : index
    %c0_0 = arith.constant 0 : index
    %0 = vector.load %arg1[%c0, %c0_0] : memref<128x128xf32, #tpu.memory_space<vmem>>, vector<128x128xf32>
    %1 = arith.truncf %0 : vector<128x128xf32> to vector<128x128xbf16>
    %c0_1 = arith.constant 0 : index
    %c0_2 = arith.constant 0 : index
    %2 = vector.load %arg2[%c0_1, %c0_2] : memref<128x256xbf16, #tpu.memory_space<vmem>>, vector<128x256xbf16>
    %cst = arith.constant dense<0.000000e+00> : vector<128x256xf32>
    %3 = tpu.matmul %1, %2, %cst {dimension_numbers = #tpu.dot_dimension_numbers<[1], [0], [0], [1], [0, 0, 1, 1], [], []>} : vector<128x128xbf16>, vector<128x256xbf16>, vector<128x256xf32> -> vector<128x256xf32>
    %4 = arith.truncf %3 : vector<128x256xf32> to vector<128x256xbf16>
    %c0_3 = arith.constant 0 : index
    %c0_4 = arith.constant 0 : index
    %5 = vector.load %arg3[%c0_3, %c0_4] : memref<128x256xbf16, #tpu.memory_space<vmem>>, vector<128x256xbf16>
    tpu.vector_store %arg3[%c0_3, %c0_4], %4 {strides = array<i32>} : memref<128x256xbf16, #tpu.memory_space<vmem>>, vector<128x256xbf16>,
    return
  }
  func.func @transform_0(%arg0: i32) -> (i32, i32) {
    %c0_i32 = arith.constant 0 : i32
    %c0_i32_0 = arith.constant 0 : i32
    return %arg0, %c0_i32 : i32, i32
  }
  func.func @transform_1(%arg0: i32) -> (i32, i32) {
    %c0_i32 = arith.constant 0 : i32
    %c0_i32_0 = arith.constant 0 : i32
    %c0_i32_1 = arith.constant 0 : i32
    return %c0_i32, %c0_i32_0 : i32, i32
  }
  func.func @transform_2(%arg0: i32) -> (i32, i32) {
    %c0_i32 = arith.constant 0 : i32
    %c0_i32_0 = arith.constant 0 : i32
    return %arg0, %c0_i32 : i32, i32
  }
}

module attributes {stable_mosaic.version = 11 : i64} {
  func.func @_proj_kernel(%arg0: i32, %arg1: memref<128x128xf32, #tpu.memory_space<vmem>>, %arg2: memref<128x256xbf16, #tpu.memory_space<vmem>>, %arg3: memref<128x256xbf16, #tpu.memory_space<vmem>>) attributes {dimension_semantics = [#tpu.dimension_semantics<parallel>], iteration_bounds = array<i64: 2>, scalar_prefetch = 0 : i64, scratch_operands = 0 : i64, tpu.core_type = #tpu.core_type<tc>, window_params = [{transform_indices = @transform_0, window_bounds = array<i64: 128, 128>}, {pipeline_mode = #tpu.pipeline_mode<synchronous>, transform_indices = @transform_1, window_bounds = array<i64: 128, 256>}, {transform_indices = @transform_2, window_bounds = array<i64: 128, 256>}]} {
    %c0 = arith.constant 0 : index
    %c0_0 = arith.constant 0 : index
    %0 = vector.load %arg1[%c0, %c0_0] : memref<128x128xf32, #tpu.memory_space<vmem>>, vector<128x128xf32>
    %1 = arith.truncf %0 : vector<128x128xf32> to vector<128x128xbf16>
    %c0_1 = arith.constant 0 : index
    %c0_2 = arith.constant 0 : index
    %2 = vector.load %arg2[%c0_1, %c0_2] : memref<128x256xbf16, #tpu.memory_space<vmem>>, vector<128x256xbf16>
    %cst = arith.constant dense<0.000000e+00> : vector<128x256xf32>
    %3 = tpu.matmul %1, %2, %cst {dimension_numbers = #tpu.dot_dimension_numbers<[1], [0], [0], [1], [0, 0, 1, 1], [], []>} : vector<128x128xbf16>, vector<128x256xbf16>, vector<128x256xf32> -> vector<128x256xf32>
    %4 = arith.truncf %3 : vector<128x256xf32> to vector<128x256xbf16>
    %c0_3 = arith.constant 0 : index
    %c0_4 = arith.constant 0 : index
    %5 = vector.load %arg3[%c0_3, %c0_4] : memref<128x256xbf16, #tpu.memory_space<vmem>>, vector<128x256xbf16>
    tpu.vector_store %arg3[%c0_3, %c0_4], %4 {strides = array<i32>} : memref<128x256xbf16, #tpu.memory_space<vmem>>, vector<128x256xbf16>,
    return
  }
  func.func @transform_0(%arg0: i32) -> (i32, i32) {
    %c0_i32 = arith.constant 0 : i32
    %c0_i32_0 = arith.constant 0 : i32
    return %arg0, %c0_i32 : i32, i32
  }
  func.func @transform_1(%arg0: i32) -> (i32, i32) {
    %c0_i32 = arith.constant 0 : i32
    %c0_i32_0 = arith.constant 0 : i32
    %c0_i32_1 = arith.constant 0 : i32
    return %c0_i32, %c0_i32_0 : i32, i32
  }
  func.func @transform_2(%arg0: i32) -> (i32, i32) {
    %c0_i32 = arith.constant 0 : i32
    %c0_i32_0 = arith.constant 0 : i32
    return %arg0, %c0_i32 : i32, i32
  }
}

</mosaic_0001>

<llo_original>
// kernel: tpu_custom_call.1
$region0: #{tpu_custom_call.1}
  #allocation0 [shape = 'u32[]', space=smem, size = 0x4, offset = 0x4, fixed_abs, tag = 'smem constant byte address 0x4 - core index']
  #allocation1 [shape = 'u32[72,128]{1,0:T(1,128)}', space=vmem, size = 0x9000, scoped, tag = 'internal scratch']
  %s0 = inlined_call_operand.hbm [shape: f32[256,128], index: 0, kind: input, shape index: {}]
  %s1 = inlined_call_operand.hbm [shape: bf16[128,256], index: 1, kind: input, shape index: {}]
  %s2 = inlined_call_operand.hbm [shape: bf16[256,256], index: 2, kind: output, shape index: {}]
  %s3 = sld [smem:[#allocation0]]
  $region49: #{tpu_custom_call.1} parent=0
    _
  %s5 = ssub.s32 1, %s3
  %s6 = scalar_select 0, %s5, %s3
  $region1: #{tpu_custom_call.1} parent=0
    #allocation2 [shape = 'u8[131072]{0}', space=vmem, size = 0x20000, scoped, tag = 'input window, operand 0']
    #allocation3 [shape = 's32[2]{0}', space=sflag, size = 0x8, scoped, tag = 'scoped memory for tpu_custom_call.1']
    #allocation4 [shape = 's32[2]{0}', space=sflag, size = 0x8, scoped, tag = 'scoped memory for tpu_custom_call.1']
    #allocation5 [shape = 'u8[65536]{0}', space=vmem, size = 0x10000, scoped, tag = 'input window, operand 1, single buffered']
    #allocation6 [shape = 's32[1]{0}', space=sflag, size = 0x4, scoped, tag = 'scoped memory for tpu_custom_call.1']
    #allocation7 [shape = 'u8[131072]{0}', space=vmem, size = 0x20000, scoped, tag = 'output window, operand 0']
    %7 = vsyncpa [#allocation3], 0
    %s8 = scalar_lea.sflag [#allocation3], 1
    %9 = vsyncpa %s8, 0
    %10 = vsyncpa [#allocation6], 0
    %11 = vsyncpa [#allocation4], 0
    %s12 = scalar_lea.sflag [#allocation4], 1
    %13 = vsyncpa %s12, 0
    loop: start=0, step=1, limit=4
    $region2: #{tpu_custom_call.1} parent=1 // loop_pre_header
      _
    $region3: #{tpu_custom_call.1} parent=1 // loop_header
      %s15 = sphi 0, %s19
      %p16 = scmp.ge.s32.totalorder %s15, 4
      %s25 = sphi 0, %s27
      %s28 = sphi 0, %s25
      %s29 = sphi 0, %s28
      %s45 = sphi 0, %s29
      %s49 = sphi 0, %s49
      %s51 = sphi 0, %s49
      %s52 = sphi 0, %s51
      %s66 = sphi 0, %s52
      %s72 = sphi 0, %s74
      %s75 = sphi 0, %s72
      %s76 = sphi 0, %s75
      %s92 = sphi 0, %s76
    $region4: #{tpu_custom_call.1} parent=1 // loop_header_branch
      %18 = sbr.rel (%p16) target = $region8
    $region5: #{tpu_custom_call.1} parent=1 // loop_body
      %s20 = ssub.s32 %s15, 1
      %s21 = ssub.s32 %s15, 2
      %s22 = sadd.s32 %s15, 1
      %s23 = ssub.s32 %s15, %s22
      %p24 = scmp.eq.s32.totalorder %s23, 0
      %s26 = sadd.s32 %s25, 1
      %s27 = scalar_select %p24, %s25, %s26
      %p30 = pneg %p24
      %p31 = scmp.eq.s32.totalorder %s15, 1
      %p32 = por %p30, %p31
      %p33 = scmp.ne.s32.totalorder %s25, %s28
      %p34 = scmp.eq.s32.totalorder %s15, 0
      %p35 = por %p33, %p34
      %p36 = scmp.ne.s32.totalorder %s25, %s28
      %p37 = scmp.eq.s32.totalorder %s20, 1
      %p38 = por %p36, %p37
      %p39 = scmp.ne.s32.totalorder %s28, %s29
      %p40 = scmp.eq.s32.totalorder %s20, 0
      %p41 = por %p39, %p40
      %p42 = scmp.ne.s32.totalorder %s28, %s29
      %p43 = scmp.eq.s32.totalorder %s21, 1
      %p44 = por %p42, %p43
      %p46 = scmp.ne.s32.totalorder %s29, %s45
      %p47 = scmp.eq.s32.totalorder %s21, 0
      %p48 = por %p46, %p47
      %s50 = sadd.s32 %s49, 1
      %p53 = scmp.eq.s32.totalorder %s15, 1
      %p54 = scmp.ne.s32.totalorder %s49, %s51
      %p55 = scmp.eq.s32.totalorder %s15, 0
      %p56 = por %p54, %p55
      %p57 = scmp.ne.s32.totalorder %s49, %s51
      %p58 = scmp.eq.s32.totalorder %s20, 1
      %p59 = por %p57, %p58
      %p60 = scmp.ne.s32.totalorder %s51, %s52
      %p61 = scmp.eq.s32.totalorder %s20, 0
      %p62 = por %p60, %p61
      %p63 = scmp.ne.s32.totalorder %s51, %s52
      %p64 = scmp.eq.s32.totalorder %s21, 1
      %p65 = por %p63, %p64
      %p67 = scmp.ne.s32.totalorder %s52, %s66
      %p68 = scmp.eq.s32.totalorder %s21, 0
      %p69 = por %p67, %p68
      %s70 = ssub.s32 %s15, %s22
      %p71 = scmp.eq.s32.totalorder %s70, 0
      %s73 = sadd.s32 %s72, 1
      %s74 = scalar_select %p71, %s72, %s73
      %p77 = pneg %p71
      %p78 = scmp.eq.s32.totalorder %s15, 1
      %p79 = por %p77, %p78
      %p80 = scmp.ne.s32.totalorder %s72, %s75
      %p81 = scmp.eq.s32.totalorder %s15, 0
      %p82 = por %p80, %p81
      %p83 = scmp.ne.s32.totalorder %s72, %s75
      %p84 = scmp.eq.s32.totalorder %s20, 1
      %p85 = por %p83, %p84
      %p86 = scmp.ne.s32.totalorder %s75, %s76
      %p87 = scmp.eq.s32.totalorder %s20, 0
      %p88 = por %p86, %p87
      %p89 = scmp.ne.s32.totalorder %s75, %s76
      %p90 = scmp.eq.s32.totalorder %s21, 1
      %p91 = por %p89, %p90
      %p93 = scmp.ne.s32.totalorder %s76, %s92
      %p94 = scmp.eq.s32.totalorder %s21, 0
      %p95 = por %p93, %p94
      %p96 = scmp.le.s32.totalorder 1, %s15
      %p97 = scmp.lt.s32.totalorder %s15, 3
      %p98 = pnand %p96, %p97
      %p99 = pneg %p98
      // Predicated region
      $region9: #{tpu_custom_call.1} parent=5 // pred_check
        _
      $region10: #{tpu_custom_call.1} parent=5 // pred_check_branch
        %101 = sbr.rel (%p98) target = $region12
      $region11: #{tpu_custom_call.1} parent=5 // pred_region
        %s102 = ssub.s32 %s15, 1
        // Predicated region
        $region13: #{tpu_custom_call.1} parent=11 // pred_check
          %p103 = pneg %p62
        $region14: #{tpu_custom_call.1} parent=11 // pred_check_branch
          %105 = sbr.rel (%p103) target = $region16
        $region15: #{tpu_custom_call.1} parent=11 // pred_region
          %107 = vsyncadd [#allocation6], 0
          %s108 = sshll.u32 %s1, 4
          %s109 = int_to_ptr.hbm [resolvable:$true] %s108
          %s110 = sshll.u32 [#allocation5], 4
          %s111 = int_to_ptr.vmem [resolvable:$true] %s110
          %116 = dma.hbm_to_vmem [thread:$0]  %s109, 2048, %s111, [#allocation6], 128, 128, 8
        $region16: #{tpu_custom_call.1} parent=11 // pred_fallthru
          _
      $region12: #{tpu_custom_call.1} parent=5 // pred_fallthru
        _
      %p117 = scmp.lt.s32.totalorder %s15, 2
      // Predicated region
      $region17: #{tpu_custom_call.1} parent=5 // pred_check
        %p118 = pneg %p117
      $region18: #{tpu_custom_call.1} parent=5 // pred_check_branch
        %120 = sbr.rel (%p118) target = $region20
      $region19: #{tpu_custom_call.1} parent=5 // pred_region
        // Predicated region
        $region21: #{tpu_custom_call.1} parent=19 // pred_check
          %p121 = pneg %p35
        $region22: #{tpu_custom_call.1} parent=19 // pred_check_branch
          %123 = sbr.rel (%p121) target = $region24
        $region23: #{tpu_custom_call.1} parent=19 // pred_region
          %s124 = sand.u32 %s25, 1
          %s125 = scalar_lea.sflag [#allocation3], %s124
          %s126 = sand.u32 %s25, 1
          %s127 = smul.addr %s126, 128
          %s128 = scalar_lea.vmem [#allocation2], %s127
          %s129 = smul.u32 16, %s15
          %131 = vsyncadd %s125, 0
          %s132 = smul.addr %s129, 8
          %s133 = scalar_lea.hbm %s0, %s132
          %s134 = sshll.u32 %s133, 4
          %s135 = int_to_ptr.hbm [resolvable:$true] %s134
          %s136 = sshll.u32 %s128, 4
          %s137 = int_to_ptr.vmem [resolvable:$true] %s136
          %142 = dma.hbm_to_vmem [thread:$0]  %s135, 2048, %s137, %s125, 128, 128, 8
        $region24: #{tpu_custom_call.1} parent=19 // pred_fallthru
          _
      $region20: #{tpu_custom_call.1} parent=5 // pred_fallthru
        _
      %p143 = scmp.le.s32.totalorder 1, %s15
      %p144 = scmp.lt.s32.totalorder %s15, 3
      %p145 = pnand %p143, %p144
      %p146 = pneg %p145
      // Predicated region
      $region25: #{tpu_custom_call.1} parent=5 // pred_check
        _
      $region26: #{tpu_custom_call.1} parent=5 // pred_check_branch
        %148 = sbr.rel (%p145) target = $region28
      $region27: #{tpu_custom_call.1} parent=5 // pred_region
        %s149 = ssub.s32 %s15, 1
        %s150 = sand.u32 %s28, 1
        %s151 = scalar_lea.sflag [#allocation3], %s150
        %s152 = sand.u32 %s28, 1
        %s153 = smul.addr %s152, 128
        %s154 = scalar_lea.vmem [#allocation2], %s153
        // Predicated region
        $region29: #{tpu_custom_call.1} parent=27 // pred_check
          %p155 = pneg %p41
        $region30: #{tpu_custom_call.1} parent=27 // pred_check_branch
          %157 = sbr.rel (%p155) target = $region32
        $region31: #{tpu_custom_call.1} parent=27 // pred_region
          %159 = dma.done %s151, 2048
        $region32: #{tpu_custom_call.1} parent=27 // pred_fallthru
          _
        // Predicated region
        $region33: #{tpu_custom_call.1} parent=27 // pred_check
          %p160 = pneg %p62
        $region34: #{tpu_custom_call.1} parent=27 // pred_check_branch
          %162 = sbr.rel (%p160) target = $region36
        $region35: #{tpu_custom_call.1} parent=27 // pred_region
          %164 = dma.done [#allocation6], 2048
        $region36: #{tpu_custom_call.1} parent=27 // pred_fallthru
          _
        %s165 = sand.u32 %s28, 1
        %s166 = scalar_lea.sflag [#allocation3], %s165
        %s167 = sand.u32 %s28, 1
        %s168 = smul.addr %s167, 128
        %s169 = scalar_lea.vmem [#allocation2], %s168
        %p170 = pneg %p41
        %p171 = pneg %p38
        %p172 = pneg %p62
        %p173 = pneg %p59
        %p174 = pneg %p88
        %p175 = pneg %p85
        %s176 = sand.u32 %s75, 1
        %s177 = scalar_lea.sflag [#allocation4], %s176
        %s178 = sand.u32 %s75, 1
        %s179 = smul.addr %s178, 128
        %s180 = scalar_lea.vmem [#allocation7], %s179
        %s181 = smul.u32 16, %s20
        %s182 = smul.u32 16, %s20
        %v183 = vld [vmem:[%s154] sm:$0xff]
        %v184 = vld [vmem:[%s154 + $0x8] sm:$0xff]
        %v185 = vld [vmem:[%s154 + $0x10] sm:$0xff]
        %v186 = vld [vmem:[%s154 + $0x18] sm:$0xff]
        %v187 = vld [vmem:[%s154 + $0x20] sm:$0xff]
        %v188 = vld [vmem:[%s154 + $0x28] sm:$0xff]
        %v189 = vld [vmem:[%s154 + $0x30] sm:$0xff]
        %v190 = vld [vmem:[%s154 + $0x38] sm:$0xff]
        %v191 = vld [vmem:[%s154 + $0x40] sm:$0xff]
        %v192 = vld [vmem:[%s154 + $0x48] sm:$0xff]
        %v193 = vld [vmem:[%s154 + $0x50] sm:$0xff]
        %v194 = vld [vmem:[%s154 + $0x58] sm:$0xff]
        %v195 = vld [vmem:[%s154 + $0x60] sm:$0xff]
        %v196 = vld [vmem:[%s154 + $0x68] sm:$0xff]
        %v197 = vld [vmem:[%s154 + $0x70] sm:$0xff]
        %v198 = vld [vmem:[%s154 + $0x78] sm:$0xff]
        %v199 = vpack.c.bf16 %v184, %v183
        %v200 = vpack.c.bf16 %v186, %v185
        %v201 = vpack.c.bf16 %v188, %v187
        %v202 = vpack.c.bf16 %v190, %v189
        %v203 = vpack.c.bf16 %v192, %v191
        %v204 = vpack.c.bf16 %v194, %v193
        %v205 = vpack.c.bf16 %v196, %v195
        %v206 = vpack.c.bf16 %v198, %v197
        %v207 = vld [vmem:[#allocation5] sm:$0xff]
        %v208 = vld [vmem:[#allocation5 + $0x8] sm:$0xff]
        %v209 = vld [vmem:[#allocation5 + $0x10] sm:$0xff]
        %v210 = vld [vmem:[#allocation5 + $0x18] sm:$0xff]
        %v211 = vld [vmem:[#allocation5 + $0x20] sm:$0xff]
        %v212 = vld [vmem:[#allocation5 + $0x28] sm:$0xff]
        %v213 = vld [vmem:[#allocation5 + $0x30] sm:$0xff]
        %v214 = vld [vmem:[#allocation5 + $0x38] sm:$0xff]
        %v215 = vld [vmem:[#allocation5 + $0x40] sm:$0xff]
        %v216 = vld [vmem:[#allocation5 + $0x48] sm:$0xff]
        %v217 = vld [vmem:[#allocation5 + $0x50] sm:$0xff]
        %v218 = vld [vmem:[#allocation5 + $0x58] sm:$0xff]
        %v219 = vld [vmem:[#allocation5 + $0x60] sm:$0xff]
        %v220 = vld [vmem:[#allocation5 + $0x68] sm:$0xff]
        %v221 = vld [vmem:[#allocation5 + $0x70] sm:$0xff]
        %v222 = vld [vmem:[#allocation5 + $0x78] sm:$0xff]
        %v239 = vunpack.c.l.b16 %v207
        %v240 = vunpack.c.h.b16 %v207
        %v241 = vunpack.c.l.b16 %v208
        %v242 = vunpack.c.h.b16 %v208
        %v243 = vunpack.c.l.b16 %v209
        %v244 = vunpack.c.h.b16 %v209
        %v245 = vunpack.c.l.b16 %v210
        %v246 = vunpack.c.h.b16 %v210
        %v247 = vunpack.c.l.b16 %v211
        %v248 = vunpack.c.h.b16 %v211
        %v249 = vunpack.c.l.b16 %v212
        %v250 = vunpack.c.h.b16 %v212
        %v251 = vunpack.c.l.b16 %v213
        %v252 = vunpack.c.h.b16 %v213
        %v253 = vunpack.c.l.b16 %v214
        %v254 = vunpack.c.h.b16 %v214
        %v255 = vunpack.c.l.b16 %v215
        %v256 = vunpack.c.h.b16 %v215
        %v257 = vunpack.c.l.b16 %v216
        %v258 = vunpack.c.h.b16 %v216
        %v259 = vunpack.c.l.b16 %v217
        %v260 = vunpack.c.h.b16 %v217
        %v261 = vunpack.c.l.b16 %v218
        %v262 = vunpack.c.h.b16 %v218
        %v263 = vunpack.c.l.b16 %v219
        %v264 = vunpack.c.h.b16 %v219
        %v265 = vunpack.c.l.b16 %v220
        %v266 = vunpack.c.h.b16 %v220
        %v267 = vunpack.c.l.b16 %v221
        %v268 = vunpack.c.h.b16 %v221
        %v269 = vunpack.c.l.b16 %v222
        %v270 = vunpack.c.h.b16 %v222
        %v271 = vpack.c.b16 %v241, %v239
        %v272 = vpack.c.b16 %v242, %v240
        %v273 = vpack.c.b16 %v245, %v243
        %v274 = vpack.c.b16 %v246, %v244
        %v275 = vpack.c.b16 %v249, %v247
        %v276 = vpack.c.b16 %v250, %v248
        %v277 = vpack.c.b16 %v253, %v251
        %v278 = vpack.c.b16 %v254, %v252
        %v279 = vpack.c.b16 %v257, %v255
        %v280 = vpack.c.b16 %v258, %v256
        %v281 = vpack.c.b16 %v261, %v259
        %v282 = vpack.c.b16 %v262, %v260
        %v283 = vpack.c.b16 %v265, %v263
        %v284 = vpack.c.b16 %v266, %v264
        %v285 = vpack.c.b16 %v269, %v267
        %v286 = vpack.c.b16 %v270, %v268
        %303 = vmatpush.bf16.msra.mxu0 %v285
        %304 = vmatpush.bf16.msra.mxu0 %v283
        %305 = vmatpush.bf16.msra.mxu0 %v281
        %306 = vmatpush.bf16.msra.mxu0 %v279
        %307 = vmatpush.bf16.msra.mxu0 %v277
        %308 = vmatpush.bf16.msra.mxu0 %v275
        %309 = vmatpush.bf16.msra.mxu0 %v273
        %310 = vmatpush.bf16.msra.mxu0 %v271
        %311 = vmatmul.bf16.gmra.mxu0 %v199
        %v312 = vpop.f32.mrf.mxu0
        %v313 = vadd.f32 0.0, %v312
        %v314 = vpop.f32.mrf.mxu0
        %v315 = vadd.f32 0.0, %v314
        %316 = vmatmul.bf16.gmra.mxu0 %v200
        %v317 = vpop.f32.mrf.mxu0
        %v318 = vadd.f32 0.0, %v317
        %v319 = vpop.f32.mrf.mxu0
        %v320 = vadd.f32 0.0, %v319
        %321 = vmatmul.bf16.gmra.mxu0 %v201
        %v322 = vpop.f32.mrf.mxu0
        %v323 = vadd.f32 0.0, %v322
        %v324 = vpop.f32.mrf.mxu0
        %v325 = vadd.f32 0.0, %v324
        %326 = vmatmul.bf16.gmra.mxu0 %v202
        %v327 = vpop.f32.mrf.mxu0
        %v328 = vadd.f32 0.0, %v327
        %v329 = vpop.f32.mrf.mxu0
        %v330 = vadd.f32 0.0, %v329
        %331 = vmatmul.bf16.gmra.mxu0 %v203
        %v332 = vpop.f32.mrf.mxu0
        %v333 = vadd.f32 0.0, %v332
        %v334 = vpop.f32.mrf.mxu0
        %v335 = vadd.f32 0.0, %v334
        %336 = vmatmul.bf16.gmra.mxu0 %v204
        %v337 = vpop.f32.mrf.mxu0
        %v338 = vadd.f32 0.0, %v337
        %v339 = vpop.f32.mrf.mxu0
        %v340 = vadd.f32 0.0, %v339
        %341 = vmatmul.bf16.gmra.mxu0 %v205
        %v342 = vpop.f32.mrf.mxu0
        %v343 = vadd.f32 0.0, %v342
        %v344 = vpop.f32.mrf.mxu0
        %v345 = vadd.f32 0.0, %v344
        %346 = vmatmul.bf16.gmra.mxu0 %v206
        %v347 = vpop.f32.mrf.mxu0
        %v348 = vadd.f32 0.0, %v347
        %v349 = vpop.f32.mrf.mxu0
        %v350 = vadd.f32 0.0, %v349
        %351 = vdwg.mxu0
        %352 = vmatpush.bf16.msra.mxu0 %v286
        %353 = vmatpush.bf16.msra.mxu0 %v284
        %354 = vmatpush.bf16.msra.mxu0 %v282
        %355 = vmatpush.bf16.msra.mxu0 %v280
        %356 = vmatpush.bf16.msra.mxu0 %v278
        %357 = vmatpush.bf16.msra.mxu0 %v276
        %358 = vmatpush.bf16.msra.mxu0 %v274
        %359 = vmatpush.bf16.msra.mxu0 %v272
        %360 = vmatmul.bf16.gmra.mxu0 %v199
        %v361 = vpop.f32.mrf.mxu0
        %v362 = vadd.f32 0.0, %v361
        %v363 = vpop.f32.mrf.mxu0
        %v364 = vadd.f32 0.0, %v363
        %365 = vmatmul.bf16.gmra.mxu0 %v200
        %v366 = vpop.f32.mrf.mxu0
        %v367 = vadd.f32 0.0, %v366
        %v368 = vpop.f32.mrf.mxu0
        %v369 = vadd.f32 0.0, %v368
        %370 = vmatmul.bf16.gmra.mxu0 %v201
        %v371 = vpop.f32.mrf.mxu0
        %v372 = vadd.f32 0.0, %v371
        %v373 = vpop.f32.mrf.mxu0
        %v374 = vadd.f32 0.0, %v373
        %375 = vmatmul.bf16.gmra.mxu0 %v202
        %v376 = vpop.f32.mrf.mxu0
        %v377 = vadd.f32 0.0, %v376
        %v378 = vpop.f32.mrf.mxu0
        %v379 = vadd.f32 0.0, %v378
        %380 = vmatmul.bf16.gmra.mxu0 %v203
        %v381 = vpop.f32.mrf.mxu0
        %v382 = vadd.f32 0.0, %v381
        %v383 = vpop.f32.mrf.mxu0
        %v384 = vadd.f32 0.0, %v383
        %385 = vmatmul.bf16.gmra.mxu0 %v204
        %v386 = vpop.f32.mrf.mxu0
        %v387 = vadd.f32 0.0, %v386
        %v388 = vpop.f32.mrf.mxu0
        %v389 = vadd.f32 0.0, %v388
        %390 = vmatmul.bf16.gmra.mxu0 %v205
        %v391 = vpop.f32.mrf.mxu0
        %v392 = vadd.f32 0.0, %v391
        %v393 = vpop.f32.mrf.mxu0
        %v394 = vadd.f32 0.0, %v393
        %395 = vmatmul.bf16.gmra.mxu0 %v206
        %v396 = vpop.f32.mrf.mxu0
        %v397 = vadd.f32 0.0, %v396
        %v398 = vpop.f32.mrf.mxu0
        %v399 = vadd.f32 0.0, %v398
        %400 = vdwg.mxu0
        %v401 = vpack.c.bf16 %v362, %v313
        %v402 = vpack.c.bf16 %v364, %v315
        %v403 = vpack.c.bf16 %v367, %v318
        %v404 = vpack.c.bf16 %v369, %v320
        %v405 = vpack.c.bf16 %v372, %v323
        %v406 = vpack.c.bf16 %v374, %v325
        %v407 = vpack.c.bf16 %v377, %v328
        %v408 = vpack.c.bf16 %v379, %v330
        %v409 = vpack.c.bf16 %v382, %v333
        %v410 = vpack.c.bf16 %v384, %v335
        %v411 = vpack.c.bf16 %v387, %v338
        %v412 = vpack.c.bf16 %v389, %v340
        %v413 = vpack.c.bf16 %v392, %v343
        %v414 = vpack.c.bf16 %v394, %v345
        %v415 = vpack.c.bf16 %v397, %v348
        %v416 = vpack.c.bf16 %v399, %v350
        %417 = vst [vmem:[%s180] sm:$0xff] %v401
        %418 = vst [vmem:[%s180 + $0x8] sm:$0xff] %v402
        %419 = vst [vmem:[%s180 + $0x10] sm:$0xff] %v403
        %420 = vst [vmem:[%s180 + $0x18] sm:$0xff] %v404
        %421 = vst [vmem:[%s180 + $0x20] sm:$0xff] %v405
        %422 = vst [vmem:[%s180 + $0x28] sm:$0xff] %v406
        %423 = vst [vmem:[%s180 + $0x30] sm:$0xff] %v407
        %424 = vst [vmem:[%s180 + $0x38] sm:$0xff] %v408
        %425 = vst [vmem:[%s180 + $0x40] sm:$0xff] %v409
        %426 = vst [vmem:[%s180 + $0x48] sm:$0xff] %v410
        %427 = vst [vmem:[%s180 + $0x50] sm:$0xff] %v411
        %428 = vst [vmem:[%s180 + $0x58] sm:$0xff] %v412
        %429 = vst [vmem:[%s180 + $0x60] sm:$0xff] %v413
        %430 = vst [vmem:[%s180 + $0x68] sm:$0xff] %v414
        %431 = vst [vmem:[%s180 + $0x70] sm:$0xff] %v415
        %432 = vst [vmem:[%s180 + $0x78] sm:$0xff] %v416
        %s433 = sand.u32 %s75, 1
        %s434 = scalar_lea.sflag [#allocation4], %s433
        %s435 = sand.u32 %s75, 1
        %s436 = smul.addr %s435, 128
        %s437 = scalar_lea.vmem [#allocation7], %s436
        // Predicated region
        $region37: #{tpu_custom_call.1} parent=27 // pred_check
          %p438 = pneg %p85
        $region38: #{tpu_custom_call.1} parent=27 // pred_check_branch
          %440 = sbr.rel (%p438) target = $region40
        $region39: #{tpu_custom_call.1} parent=27 // pred_region
          %s441 = smul.u32 16, %s20
          %443 = vsyncadd %s434, 0
          %s444 = smul.addr %s441, 2
          %s445 = smul.addr %s444, 4
          %s446 = scalar_lea.hbm %s2, %s445
          %s447 = sshll.u32 %s437, 4
          %s448 = int_to_ptr.vmem [resolvable:$true] %s447
          %s449 = sshll.u32 %s446, 4
          %s450 = int_to_ptr.hbm [resolvable:$true] %s449
          %455 = dma.vmem_to_hbm [thread:$0]  %s448, 2048, %s450, %s434, 128, 128, 8
        $region40: #{tpu_custom_call.1} parent=27 // pred_fallthru
          _
      $region28: #{tpu_custom_call.1} parent=5 // pred_fallthru
        _
      %p456 = scmp.le.s32.totalorder 2, %s15
      // Predicated region
      $region41: #{tpu_custom_call.1} parent=5 // pred_check
        %p457 = pneg %p456
      $region42: #{tpu_custom_call.1} parent=5 // pred_check_branch
        %459 = sbr.rel (%p457) target = $region44
      $region43: #{tpu_custom_call.1} parent=5 // pred_region
        %s460 = ssub.s32 %s15, 2
        // Predicated region
        $region45: #{tpu_custom_call.1} parent=43 // pred_check
          %p461 = pneg %p91
        $region46: #{tpu_custom_call.1} parent=43 // pred_check_branch
          %463 = sbr.rel (%p461) target = $region48
        $region47: #{tpu_custom_call.1} parent=43 // pred_region
          %s464 = sand.u32 %s76, 1
          %s465 = scalar_lea.sflag [#allocation4], %s464
          %s466 = sand.u32 %s76, 1
          %s467 = smul.addr %s466, 128
          %s468 = scalar_lea.vmem [#allocation7], %s467
          %470 = dma.done %s465, 2048
        $region48: #{tpu_custom_call.1} parent=43 // pred_fallthru
          _
      $region44: #{tpu_custom_call.1} parent=5 // pred_fallthru
        _
    $region6: #{tpu_custom_call.1} parent=1 // loop_footer
      %s19 = sadd.s32 1, %s15
    $region7: #{tpu_custom_call.1} parent=1 // loop_footer_branch
      %14 = sbr.rel target = $region3
    $region8: #{tpu_custom_call.1} parent=1 // loop_exit
      _
    %471 = vsyncpa [#allocation3], 1
    %s472 = scalar_lea.sflag [#allocation3], 1
    %473 = vsyncpa %s472, 1
    %474 = vsyncpa [#allocation6], 1
    %475 = vsyncpa [#allocation4], 1
    %s476 = scalar_lea.sflag [#allocation4], 1
    %477 = vsyncpa %s476, 1

// kernel: tpu_custom_call.1
$region0: #{tpu_custom_call.1}
  #allocation0 [shape = 'u32[]', space=smem, size = 0x4, offset = 0x4, fixed_abs, tag = 'smem constant byte address 0x4 - core index']
  #allocation1 [shape = 'u32[72,128]{1,0:T(1,128)}', space=vmem, size = 0x9000, scoped, tag = 'internal scratch']
  %s0 = inlined_call_operand.hbm [shape: f32[256,128], index: 0, kind: input, shape index: {}]
  %s1 = inlined_call_operand.hbm [shape: bf16[128,256], index: 1, kind: input, shape index: {}]
  %s2 = inlined_call_operand.hbm [shape: bf16[256,256], index: 2, kind: output, shape index: {}]
  %s3 = sld [smem:[#allocation0]]
  $region49: #{tpu_custom_call.1} parent=0
    _
  %s5 = ssub.s32 1, %s3
  %s6 = scalar_select 0, %s5, %s3
  $region1: #{tpu_custom_call.1} parent=0
    #allocation2 [shape = 'u8[131072]{0}', space=vmem, size = 0x20000, scoped, tag = 'input window, operand 0']
    #allocation3 [shape = 's32[2]{0}', space=sflag, size = 0x8, scoped, tag = 'scoped memory for tpu_custom_call.1']
    #allocation4 [shape = 's32[2]{0}', space=sflag, size = 0x8, scoped, tag = 'scoped memory for tpu_custom_call.1']
    #allocation5 [shape = 'u8[65536]{0}', space=vmem, size = 0x10000, scoped, tag = 'input window, operand 1, single buffered']
    #allocation6 [shape = 's32[1]{0}', space=sflag, size = 0x4, scoped, tag = 'scoped memory for tpu_custom_call.1']
    #allocation7 [shape = 'u8[131072]{0}', space=vmem, size = 0x20000, scoped, tag = 'output window, operand 0']
    %7 = vsyncpa [#allocation3], 0
    %s8 = scalar_lea.sflag [#allocation3], 1
    %9 = vsyncpa %s8, 0
    %10 = vsyncpa [#allocation6], 0
    %11 = vsyncpa [#allocation4], 0
    %s12 = scalar_lea.sflag [#allocation4], 1
    %13 = vsyncpa %s12, 0
    loop: start=0, step=1, limit=4
    $region2: #{tpu_custom_call.1} parent=1 // loop_pre_header
      _
    $region3: #{tpu_custom_call.1} parent=1 // loop_header
      %s15 = sphi 0, %s19
      %p16 = scmp.ge.s32.totalorder %s15, 4
      %s25 = sphi 0, %s27
      %s28 = sphi 0, %s25
      %s29 = sphi 0, %s28
      %s45 = sphi 0, %s29
      %s49 = sphi 0, %s49
      %s51 = sphi 0, %s49
      %s52 = sphi 0, %s51
      %s66 = sphi 0, %s52
      %s72 = sphi 0, %s74
      %s75 = sphi 0, %s72
      %s76 = sphi 0, %s75
      %s92 = sphi 0, %s76
    $region4: #{tpu_custom_call.1} parent=1 // loop_header_branch
      %18 = sbr.rel (%p16) target = $region8
    $region5: #{tpu_custom_call.1} parent=1 // loop_body
      %s20 = ssub.s32 %s15, 1
      %s21 = ssub.s32 %s15, 2
      %s22 = sadd.s32 %s15, 1
      %s23 = ssub.s32 %s15, %s22
      %p24 = scmp.eq.s32.totalorder %s23, 0
      %s26 = sadd.s32 %s25, 1
      %s27 = scalar_select %p24, %s25, %s26
      %p30 = pneg %p24
      %p31 = scmp.eq.s32.totalorder %s15, 1
      %p32 = por %p30, %p31
      %p33 = scmp.ne.s32.totalorder %s25, %s28
      %p34 = scmp.eq.s32.totalorder %s15, 0
      %p35 = por %p33, %p34
      %p36 = scmp.ne.s32.totalorder %s25, %s28
      %p37 = scmp.eq.s32.totalorder %s20, 1
      %p38 = por %p36, %p37
      %p39 = scmp.ne.s32.totalorder %s28, %s29
      %p40 = scmp.eq.s32.totalorder %s20, 0
      %p41 = por %p39, %p40
      %p42 = scmp.ne.s32.totalorder %s28, %s29
      %p43 = scmp.eq.s32.totalorder %s21, 1
      %p44 = por %p42, %p43
      %p46 = scmp.ne.s32.totalorder %s29, %s45
      %p47 = scmp.eq.s32.totalorder %s21, 0
      %p48 = por %p46, %p47
      %s50 = sadd.s32 %s49, 1
      %p53 = scmp.eq.s32.totalorder %s15, 1
      %p54 = scmp.ne.s32.totalorder %s49, %s51
      %p55 = scmp.eq.s32.totalorder %s15, 0
      %p56 = por %p54, %p55
      %p57 = scmp.ne.s32.totalorder %s49, %s51
      %p58 = scmp.eq.s32.totalorder %s20, 1
      %p59 = por %p57, %p58
      %p60 = scmp.ne.s32.totalorder %s51, %s52
      %p61 = scmp.eq.s32.totalorder %s20, 0
      %p62 = por %p60, %p61
      %p63 = scmp.ne.s32.totalorder %s51, %s52
      %p64 = scmp.eq.s32.totalorder %s21, 1
      %p65 = por %p63, %p64
      %p67 = scmp.ne.s32.totalorder %s52, %s66
      %p68 = scmp.eq.s32.totalorder %s21, 0
      %p69 = por %p67, %p68
      %s70 = ssub.s32 %s15, %s22
      %p71 = scmp.eq.s32.totalorder %s70, 0
      %s73 = sadd.s32 %s72, 1
      %s74 = scalar_select %p71, %s72, %s73
      %p77 = pneg %p71
      %p78 = scmp.eq.s32.totalorder %s15, 1
      %p79 = por %p77, %p78
      %p80 = scmp.ne.s32.totalorder %s72, %s75
      %p81 = scmp.eq.s32.totalorder %s15, 0
      %p82 = por %p80, %p81
      %p83 = scmp.ne.s32.totalorder %s72, %s75
      %p84 = scmp.eq.s32.totalorder %s20, 1
      %p85 = por %p83, %p84
      %p86 = scmp.ne.s32.totalorder %s75, %s76
      %p87 = scmp.eq.s32.totalorder %s20, 0
      %p88 = por %p86, %p87
      %p89 = scmp.ne.s32.totalorder %s75, %s76
      %p90 = scmp.eq.s32.totalorder %s21, 1
      %p91 = por %p89, %p90
      %p93 = scmp.ne.s32.totalorder %s76, %s92
      %p94 = scmp.eq.s32.totalorder %s21, 0
      %p95 = por %p93, %p94
      %p96 = scmp.le.s32.totalorder 1, %s15
      %p97 = scmp.lt.s32.totalorder %s15, 3
      %p98 = pnand %p96, %p97
      %p99 = pneg %p98
      // Predicated region
      $region9: #{tpu_custom_call.1} parent=5 // pred_check
        _
      $region10: #{tpu_custom_call.1} parent=5 // pred_check_branch
        %101 = sbr.rel (%p98) target = $region12
      $region11: #{tpu_custom_call.1} parent=5 // pred_region
        %s102 = ssub.s32 %s15, 1
        // Predicated region
        $region13: #{tpu_custom_call.1} parent=11 // pred_check
          %p103 = pneg %p62
        $region14: #{tpu_custom_call.1} parent=11 // pred_check_branch
          %105 = sbr.rel (%p103) target = $region16
        $region15: #{tpu_custom_call.1} parent=11 // pred_region
          %107 = vsyncadd [#allocation6], 0
          %s108 = sshll.u32 %s1, 4
          %s109 = int_to_ptr.hbm [resolvable:$true] %s108
          %s110 = sshll.u32 [#allocation5], 4
          %s111 = int_to_ptr.vmem [resolvable:$true] %s110
          %116 = dma.hbm_to_vmem [thread:$0]  %s109, 2048, %s111, [#allocation6], 128, 128, 8
        $region16: #{tpu_custom_call.1} parent=11 // pred_fallthru
          _
      $region12: #{tpu_custom_call.1} parent=5 // pred_fallthru
        _
      %p117 = scmp.lt.s32.totalorder %s15, 2
      // Predicated region
      $region17: #{tpu_custom_call.1} parent=5 // pred_check
        %p118 = pneg %p117
      $region18: #{tpu_custom_call.1} parent=5 // pred_check_branch
        %120 = sbr.rel (%p118) target = $region20
      $region19: #{tpu_custom_call.1} parent=5 // pred_region
        // Predicated region
        $region21: #{tpu_custom_call.1} parent=19 // pred_check
          %p121 = pneg %p35
        $region22: #{tpu_custom_call.1} parent=19 // pred_check_branch
          %123 = sbr.rel (%p121) target = $region24
        $region23: #{tpu_custom_call.1} parent=19 // pred_region
          %s124 = sand.u32 %s25, 1
          %s125 = scalar_lea.sflag [#allocation3], %s124
          %s126 = sand.u32 %s25, 1
          %s127 = smul.addr %s126, 128
          %s128 = scalar_lea.vmem [#allocation2], %s127
          %s129 = smul.u32 16, %s15
          %131 = vsyncadd %s125, 0
          %s132 = smul.addr %s129, 8
          %s133 = scalar_lea.hbm %s0, %s132
          %s134 = sshll.u32 %s133, 4
          %s135 = int_to_ptr.hbm [resolvable:$true] %s134
          %s136 = sshll.u32 %s128, 4
          %s137 = int_to_ptr.vmem [resolvable:$true] %s136
          %142 = dma.hbm_to_vmem [thread:$0]  %s135, 2048, %s137, %s125, 128, 128, 8
        $region24: #{tpu_custom_call.1} parent=19 // pred_fallthru
          _
      $region20: #{tpu_custom_call.1} parent=5 // pred_fallthru
        _
      %p143 = scmp.le.s32.totalorder 1, %s15
      %p144 = scmp.lt.s32.totalorder %s15, 3
      %p145 = pnand %p143, %p144
      %p146 = pneg %p145
      // Predicated region
      $region25: #{tpu_custom_call.1} parent=5 // pred_check
        _
      $region26: #{tpu_custom_call.1} parent=5 // pred_check_branch
        %148 = sbr.rel (%p145) target = $region28
      $region27: #{tpu_custom_call.1} parent=5 // pred_region
        %s149 = ssub.s32 %s15, 1
        %s150 = sand.u32 %s28, 1
        %s151 = scalar_lea.sflag [#allocation3], %s150
        %s152 = sand.u32 %s28, 1
        %s153 = smul.addr %s152, 128
        %s154 = scalar_lea.vmem [#allocation2], %s153
        // Predicated region
        $region29: #{tpu_custom_call.1} parent=27 // pred_check
          %p155 = pneg %p41
        $region30: #{tpu_custom_call.1} parent=27 // pred_check_branch
          %157 = sbr.rel (%p155) target = $region32
        $region31: #{tpu_custom_call.1} parent=27 // pred_region
          %159 = dma.done %s151, 2048
        $region32: #{tpu_custom_call.1} parent=27 // pred_fallthru
          _
        // Predicated region
        $region33: #{tpu_custom_call.1} parent=27 // pred_check
          %p160 = pneg %p62
        $region34: #{tpu_custom_call.1} parent=27 // pred_check_branch
          %162 = sbr.rel (%p160) target = $region36
        $region35: #{tpu_custom_call.1} parent=27 // pred_region
          %164 = dma.done [#allocation6], 2048
        $region36: #{tpu_custom_call.1} parent=27 // pred_fallthru
          _
        %s165 = sand.u32 %s28, 1
        %s166 = scalar_lea.sflag [#allocation3], %s165
        %s167 = sand.u32 %s28, 1
        %s168 = smul.addr %s167, 128
        %s169 = scalar_lea.vmem [#allocation2], %s168
        %p170 = pneg %p41
        %p171 = pneg %p38
        %p172 = pneg %p62
        %p173 = pneg %p59
        %p174 = pneg %p88
        %p175 = pneg %p85
        %s176 = sand.u32 %s75, 1
        %s177 = scalar_lea.sflag [#allocation4], %s176
        %s178 = sand.u32 %s75, 1
        %s179 = smul.addr %s178, 128
        %s180 = scalar_lea.vmem [#allocation7], %s179
        %s181 = smul.u32 16, %s20
        %s182 = smul.u32 16, %s20
        %v183 = vld [vmem:[%s154] sm:$0xff]
        %v184 = vld [vmem:[%s154 + $0x8] sm:$0xff]
        %v185 = vld [vmem:[%s154 + $0x10] sm:$0xff]
        %v186 = vld [vmem:[%s154 + $0x18] sm:$0xff]
        %v187 = vld [vmem:[%s154 + $0x20] sm:$0xff]
        %v188 = vld [vmem:[%s154 + $0x28] sm:$0xff]
        %v189 = vld [vmem:[%s154 + $0x30] sm:$0xff]
        %v190 = vld [vmem:[%s154 + $0x38] sm:$0xff]
        %v191 = vld [vmem:[%s154 + $0x40] sm:$0xff]
        %v192 = vld [vmem:[%s154 + $0x48] sm:$0xff]
        %v193 = vld [vmem:[%s154 + $0x50] sm:$0xff]
        %v194 = vld [vmem:[%s154 + $0x58] sm:$0xff]
        %v195 = vld [vmem:[%s154 + $0x60] sm:$0xff]
        %v196 = vld [vmem:[%s154 + $0x68] sm:$0xff]
        %v197 = vld [vmem:[%s154 + $0x70] sm:$0xff]
        %v198 = vld [vmem:[%s154 + $0x78] sm:$0xff]
        %v199 = vpack.c.bf16 %v184, %v183
        %v200 = vpack.c.bf16 %v186, %v185
        %v201 = vpack.c.bf16 %v188, %v187
        %v202 = vpack.c.bf16 %v190, %v189
        %v203 = vpack.c.bf16 %v192, %v191
        %v204 = vpack.c.bf16 %v194, %v193
        %v205 = vpack.c.bf16 %v196, %v195
        %v206 = vpack.c.bf16 %v198, %v197
        %v207 = vld [vmem:[#allocation5] sm:$0xff]
        %v208 = vld [vmem:[#allocation5 + $0x8] sm:$0xff]
        %v209 = vld [vmem:[#allocation5 + $0x10] sm:$0xff]
        %v210 = vld [vmem:[#allocation5 + $0x18] sm:$0xff]
        %v211 = vld [vmem:[#allocation5 + $0x20] sm:$0xff]
        %v212 = vld [vmem:[#allocation5 + $0x28] sm:$0xff]
        %v213 = vld [vmem:[#allocation5 + $0x30] sm:$0xff]
        %v214 = vld [vmem:[#allocation5 + $0x38] sm:$0xff]
        %v215 = vld [vmem:[#allocation5 + $0x40] sm:$0xff]
        %v216 = vld [vmem:[#allocation5 + $0x48] sm:$0xff]
        %v217 = vld [vmem:[#allocation5 + $0x50] sm:$0xff]
        %v218 = vld [vmem:[#allocation5 + $0x58] sm:$0xff]
        %v219 = vld [vmem:[#allocation5 + $0x60] sm:$0xff]
        %v220 = vld [vmem:[#allocation5 + $0x68] sm:$0xff]
        %v221 = vld [vmem:[#allocation5 + $0x70] sm:$0xff]
        %v222 = vld [vmem:[#allocation5 + $0x78] sm:$0xff]
        %v239 = vunpack.c.l.b16 %v207
        %v240 = vunpack.c.h.b16 %v207
        %v241 = vunpack.c.l.b16 %v208
        %v242 = vunpack.c.h.b16 %v208
        %v243 = vunpack.c.l.b16 %v209
        %v244 = vunpack.c.h.b16 %v209
        %v245 = vunpack.c.l.b16 %v210
        %v246 = vunpack.c.h.b16 %v210
        %v247 = vunpack.c.l.b16 %v211
        %v248 = vunpack.c.h.b16 %v211
        %v249 = vunpack.c.l.b16 %v212
        %v250 = vunpack.c.h.b16 %v212
        %v251 = vunpack.c.l.b16 %v213
        %v252 = vunpack.c.h.b16 %v213
        %v253 = vunpack.c.l.b16 %v214
        %v254 = vunpack.c.h.b16 %v214
        %v255 = vunpack.c.l.b16 %v215
        %v256 = vunpack.c.h.b16 %v215
        %v257 = vunpack.c.l.b16 %v216
        %v258 = vunpack.c.h.b16 %v216
        %v259 = vunpack.c.l.b16 %v217
        %v260 = vunpack.c.h.b16 %v217
        %v261 = vunpack.c.l.b16 %v218
        %v262 = vunpack.c.h.b16 %v218
        %v263 = vunpack.c.l.b16 %v219
        %v264 = vunpack.c.h.b16 %v219
        %v265 = vunpack.c.l.b16 %v220
        %v266 = vunpack.c.h.b16 %v220
        %v267 = vunpack.c.l.b16 %v221
        %v268 = vunpack.c.h.b16 %v221
        %v269 = vunpack.c.l.b16 %v222
        %v270 = vunpack.c.h.b16 %v222
        %v271 = vpack.c.b16 %v241, %v239
        %v272 = vpack.c.b16 %v242, %v240
        %v273 = vpack.c.b16 %v245, %v243
        %v274 = vpack.c.b16 %v246, %v244
        %v275 = vpack.c.b16 %v249, %v247
        %v276 = vpack.c.b16 %v250, %v248
        %v277 = vpack.c.b16 %v253, %v251
        %v278 = vpack.c.b16 %v254, %v252
        %v279 = vpack.c.b16 %v257, %v255
        %v280 = vpack.c.b16 %v258, %v256
        %v281 = vpack.c.b16 %v261, %v259
        %v282 = vpack.c.b16 %v262, %v260
        %v283 = vpack.c.b16 %v265, %v263
        %v284 = vpack.c.b16 %v266, %v264
        %v285 = vpack.c.b16 %v269, %v267
        %v286 = vpack.c.b16 %v270, %v268
        %303 = vmatpush.bf16.msra.mxu0 %v285
        %304 = vmatpush.bf16.msra.mxu0 %v283
        %305 = vmatpush.bf16.msra.mxu0 %v281
        %306 = vmatpush.bf16.msra.mxu0 %v279
        %307 = vmatpush.bf16.msra.mxu0 %v277
        %308 = vmatpush.bf16.msra.mxu0 %v275
        %309 = vmatpush.bf16.msra.mxu0 %v273
        %310 = vmatpush.bf16.msra.mxu0 %v271
        %311 = vmatmul.bf16.gmra.mxu0 %v199
        %v312 = vpop.f32.mrf.mxu0
        %v313 = vadd.f32 0.0, %v312
        %v314 = vpop.f32.mrf.mxu0
        %v315 = vadd.f32 0.0, %v314
        %316 = vmatmul.bf16.gmra.mxu0 %v200
        %v317 = vpop.f32.mrf.mxu0
        %v318 = vadd.f32 0.0, %v317
        %v319 = vpop.f32.mrf.mxu0
        %v320 = vadd.f32 0.0, %v319
        %321 = vmatmul.bf16.gmra.mxu0 %v201
        %v322 = vpop.f32.mrf.mxu0
        %v323 = vadd.f32 0.0, %v322
        %v324 = vpop.f32.mrf.mxu0
        %v325 = vadd.f32 0.0, %v324
        %326 = vmatmul.bf16.gmra.mxu0 %v202
        %v327 = vpop.f32.mrf.mxu0
        %v328 = vadd.f32 0.0, %v327
        %v329 = vpop.f32.mrf.mxu0
        %v330 = vadd.f32 0.0, %v329
        %331 = vmatmul.bf16.gmra.mxu0 %v203
        %v332 = vpop.f32.mrf.mxu0
        %v333 = vadd.f32 0.0, %v332
        %v334 = vpop.f32.mrf.mxu0
        %v335 = vadd.f32 0.0, %v334
        %336 = vmatmul.bf16.gmra.mxu0 %v204
        %v337 = vpop.f32.mrf.mxu0
        %v338 = vadd.f32 0.0, %v337
        %v339 = vpop.f32.mrf.mxu0
        %v340 = vadd.f32 0.0, %v339
        %341 = vmatmul.bf16.gmra.mxu0 %v205
        %v342 = vpop.f32.mrf.mxu0
        %v343 = vadd.f32 0.0, %v342
        %v344 = vpop.f32.mrf.mxu0
        %v345 = vadd.f32 0.0, %v344
        %346 = vmatmul.bf16.gmra.mxu0 %v206
        %v347 = vpop.f32.mrf.mxu0
        %v348 = vadd.f32 0.0, %v347
        %v349 = vpop.f32.mrf.mxu0
        %v350 = vadd.f32 0.0, %v349
        %351 = vdwg.mxu0
        %352 = vmatpush.bf16.msra.mxu0 %v286
        %353 = vmatpush.bf16.msra.mxu0 %v284
        %354 = vmatpush.bf16.msra.mxu0 %v282
        %355 = vmatpush.bf16.msra.mxu0 %v280
        %356 = vmatpush.bf16.msra.mxu0 %v278
        %357 = vmatpush.bf16.msra.mxu0 %v276
        %358 = vmatpush.bf16.msra.mxu0 %v274
        %359 = vmatpush.bf16.msra.mxu0 %v272
        %360 = vmatmul.bf16.gmra.mxu0 %v199
        %v361 = vpop.f32.mrf.mxu0
        %v362 = vadd.f32 0.0, %v361
        %v363 = vpop.f32.mrf.mxu0
        %v364 = vadd.f32 0.0, %v363
        %365 = vmatmul.bf16.gmra.mxu0 %v200
        %v366 = vpop.f32.mrf.mxu0
        %v367 = vadd.f32 0.0, %v366
        %v368 = vpop.f32.mrf.mxu0
        %v369 = vadd.f32 0.0, %v368
        %370 = vmatmul.bf16.gmra.mxu0 %v201
        %v371 = vpop.f32.mrf.mxu0
        %v372 = vadd.f32 0.0, %v371
        %v373 = vpop.f32.mrf.mxu0
        %v374 = vadd.f32 0.0, %v373
        %375 = vmatmul.bf16.gmra.mxu0 %v202
        %v376 = vpop.f32.mrf.mxu0
        %v377 = vadd.f32 0.0, %v376
        %v378 = vpop.f32.mrf.mxu0
        %v379 = vadd.f32 0.0, %v378
        %380 = vmatmul.bf16.gmra.mxu0 %v203
        %v381 = vpop.f32.mrf.mxu0
        %v382 = vadd.f32 0.0, %v381
        %v383 = vpop.f32.mrf.mxu0
        %v384 = vadd.f32 0.0, %v383
        %385 = vmatmul.bf16.gmra.mxu0 %v204
        %v386 = vpop.f32.mrf.mxu0
        %v387 = vadd.f32 0.0, %v386
        %v388 = vpop.f32.mrf.mxu0
        %v389 = vadd.f32 0.0, %v388
        %390 = vmatmul.bf16.gmra.mxu0 %v205
        %v391 = vpop.f32.mrf.mxu0
        %v392 = vadd.f32 0.0, %v391
        %v393 = vpop.f32.mrf.mxu0
        %v394 = vadd.f32 0.0, %v393
        %395 = vmatmul.bf16.gmra.mxu0 %v206
        %v396 = vpop.f32.mrf.mxu0
        %v397 = vadd.f32 0.0, %v396
        %v398 = vpop.f32.mrf.mxu0
        %v399 = vadd.f32 0.0, %v398
        %400 = vdwg.mxu0
        %v401 = vpack.c.bf16 %v362, %v313
        %v402 = vpack.c.bf16 %v364, %v315
        %v403 = vpack.c.bf16 %v367, %v318
        %v404 = vpack.c.bf16 %v369, %v320
        %v405 = vpack.c.bf16 %v372, %v323
        %v406 = vpack.c.bf16 %v374, %v325
        %v407 = vpack.c.bf16 %v377, %v328
        %v408 = vpack.c.bf16 %v379, %v330
        %v409 = vpack.c.bf16 %v382, %v333
        %v410 = vpack.c.bf16 %v384, %v335
        %v411 = vpack.c.bf16 %v387, %v338
        %v412 = vpack.c.bf16 %v389, %v340
        %v413 = vpack.c.bf16 %v392, %v343
        %v414 = vpack.c.bf16 %v394, %v345
        %v415 = vpack.c.bf16 %v397, %v348
        %v416 = vpack.c.bf16 %v399, %v350
        %417 = vst [vmem:[%s180] sm:$0xff] %v401
        %418 = vst [vmem:[%s180 + $0x8] sm:$0xff] %v402
        %419 = vst [vmem:[%s180 + $0x10] sm:$0xff] %v403
        %420 = vst [vmem:[%s180 + $0x18] sm:$0xff] %v404
        %421 = vst [vmem:[%s180 + $0x20] sm:$0xff] %v405
        %422 = vst [vmem:[%s180 + $0x28] sm:$0xff] %v406
        %423 = vst [vmem:[%s180 + $0x30] sm:$0xff] %v407
        %424 = vst [vmem:[%s180 + $0x38] sm:$0xff] %v408
        %425 = vst [vmem:[%s180 + $0x40] sm:$0xff] %v409
        %426 = vst [vmem:[%s180 + $0x48] sm:$0xff] %v410
        %427 = vst [vmem:[%s180 + $0x50] sm:$0xff] %v411
        %428 = vst [vmem:[%s180 + $0x58] sm:$0xff] %v412
        %429 = vst [vmem:[%s180 + $0x60] sm:$0xff] %v413
        %430 = vst [vmem:[%s180 + $0x68] sm:$0xff] %v414
        %431 = vst [vmem:[%s180 + $0x70] sm:$0xff] %v415
        %432 = vst [vmem:[%s180 + $0x78] sm:$0xff] %v416
        %s433 = sand.u32 %s75, 1
        %s434 = scalar_lea.sflag [#allocation4], %s433
        %s435 = sand.u32 %s75, 1
        %s436 = smul.addr %s435, 128
        %s437 = scalar_lea.vmem [#allocation7], %s436
        // Predicated region
        $region37: #{tpu_custom_call.1} parent=27 // pred_check
          %p438 = pneg %p85
        $region38: #{tpu_custom_call.1} parent=27 // pred_check_branch
          %440 = sbr.rel (%p438) target = $region40
        $region39: #{tpu_custom_call.1} parent=27 // pred_region
          %s441 = smul.u32 16, %s20
          %443 = vsyncadd %s434, 0
          %s444 = smul.addr %s441, 2
          %s445 = smul.addr %s444, 4
          %s446 = scalar_lea.hbm %s2, %s445
          %s447 = sshll.u32 %s437, 4
          %s448 = int_to_ptr.vmem [resolvable:$true] %s447
          %s449 = sshll.u32 %s446, 4
          %s450 = int_to_ptr.hbm [resolvable:$true] %s449
          %455 = dma.vmem_to_hbm [thread:$0]  %s448, 2048, %s450, %s434, 128, 128, 8
        $region40: #{tpu_custom_call.1} parent=27 // pred_fallthru
          _
      $region28: #{tpu_custom_call.1} parent=5 // pred_fallthru
        _
      %p456 = scmp.le.s32.totalorder 2, %s15
      // Predicated region
      $region41: #{tpu_custom_call.1} parent=5 // pred_check
        %p457 = pneg %p456
      $region42: #{tpu_custom_call.1} parent=5 // pred_check_branch
        %459 = sbr.rel (%p457) target = $region44
      $region43: #{tpu_custom_call.1} parent=5 // pred_region
        %s460 = ssub.s32 %s15, 2
        // Predicated region
        $region45: #{tpu_custom_call.1} parent=43 // pred_check
          %p461 = pneg %p91
        $region46: #{tpu_custom_call.1} parent=43 // pred_check_branch
          %463 = sbr.rel (%p461) target = $region48
        $region47: #{tpu_custom_call.1} parent=43 // pred_region
          %s464 = sand.u32 %s76, 1
          %s465 = scalar_lea.sflag [#allocation4], %s464
          %s466 = sand.u32 %s76, 1
          %s467 = smul.addr %s466, 128
          %s468 = scalar_lea.vmem [#allocation7], %s467
          %470 = dma.done %s465, 2048
        $region48: #{tpu_custom_call.1} parent=43 // pred_fallthru
          _
      $region44: #{tpu_custom_call.1} parent=5 // pred_fallthru
        _
    $region6: #{tpu_custom_call.1} parent=1 // loop_footer
      %s19 = sadd.s32 1, %s15
    $region7: #{tpu_custom_call.1} parent=1 // loop_footer_branch
      %14 = sbr.rel target = $region3
    $region8: #{tpu_custom_call.1} parent=1 // loop_exit
      _
    %471 = vsyncpa [#allocation3], 1
    %s472 = scalar_lea.sflag [#allocation3], 1
    %473 = vsyncpa %s472, 1
    %474 = vsyncpa [#allocation6], 1
    %475 = vsyncpa [#allocation4], 1
    %s476 = scalar_lea.sflag [#allocation4], 1
    %477 = vsyncpa %s476, 1

</llo_original>
